<compile_context>
chip_gen: v6e
topology: v6e:2x2x1
jax: 0.10.0
libtpu: 0.0.40
codegen_flags: <defaults>
</compile_context>

<pallas_src>
import jax
import jax.numpy as jnp
from jax.experimental import pallas as pl
from jax.experimental.pallas import tpu as pltpu

_LANE = 128           # vreg lane width
_MIB = 1024 * 1024


def _round_up(x, m):
    return ((x + m - 1) // m) * m


def _pad_to(x, shape):
    pads = tuple((0, t - s) for s, t in zip(x.shape, shape))
    if all(p == (0, 0) for p in pads):
        return x
    return jnp.pad(x, pads)


def _vmem_cap_bytes():
    """Per-core VMEM capacity with ~15% headroom for compiler/internal scratch."""
    cap = 64 * _MIB  # conservative fallback (v7x per-TC size)
    try:
        info = pltpu.get_tpu_info()
        cap = int(getattr(info, "vmem_capacity_bytes", cap))
    except Exception:
        pass
    return int(cap * 0.85)


def _vmem_estimate(tm, dim, D, mm_itemsize, out_itemsize, weight_bufs):
    """Corrected VMEM budget: f32 streamed inputs, f32 output, resident weights at their
    actual buffer count, plus the in-kernel f32 accumulators / casted temporaries."""
    act = 2 * 2 * tm * dim * 4                                  # 2 f32 inputs, double-buffered
    outb = 2 * tm * dim * out_itemsize                          # double-buffered output block
    wgts = weight_bufs * (2 * dim * D + D * dim) * mm_itemsize  # W1s, W1h, W2
    bias = weight_bufs * (D + dim) * 4                          # b1, b2 (f32)
    tmps = 3 * tm * D * 4 + 2 * tm * D * mm_itemsize            # hidden/acc f32 + cast copies
    return act + outb + wgts + bias + tmps


def _transition_kernel(s_ref, h_ref, w1s_ref, w1h_ref, b1_ref, w2_ref, b2_ref, o_ref):
    """relu(concat(s, h) @ W1 + b1) @ W2 + b2, concat folded into two MXU matmuls."""
    mdt = w1s_ref.dtype
    # f32 -> matmul-dtype cast on the VPU (hidden under MXU slack); no wrapper astype pass.
    s = s_ref[...].astype(mdt)
    h = h_ref[...].astype(mdt)
    hidden = (
        jnp.dot(s, w1s_ref[...], preferred_element_type=jnp.float32)
        + jnp.dot(h, w1h_ref[...], preferred_element_type=jnp.float32)
        + b1_ref[...]
    )
    hidden = jnp.maximum(hidden, 0.0).astype(mdt)
    out = jnp.dot(hidden, w2_ref[...], preferred_element_type=jnp.float32) + b2_ref[...]
    o_ref[...] = out.astype(o_ref.dtype)


def _transition_net_impl(s_prev, h_prev, params, *, block_m, matmul_dtype,
                         single_buffer_weights):
    w1s, w1h, b1, w2, b2 = params
    B, dim = s_prev.shape
    assert h_prev.shape == (B, dim)

    mm_itemsize = jnp.dtype(matmul_dtype).itemsize
    out_dtype = s_prev.dtype
    out_itemsize = jnp.dtype(out_dtype).itemsize

    # Lane-aligned hidden width. Only the (tiny, one-time) weights/biases are padded:
    # padded W1 columns + padded b1 lanes are 0 -> padded hidden lanes are relu(0) = 0,
    # and padded W2 rows are 0, so the (B, dim) output is exact.
    D = _round_up(max(dim, _LANE), _LANE)
    granule = 16 if mm_itemsize == 2 else 8   # sublane packing granule for the matmul dtype

    if block_m is None:
        block_m = 1024 if mm_itemsize == 2 else 512
    tm = min(_round_up(block_m, granule), _round_up(B, granule))

    vmem_cap = _vmem_cap_bytes()
    weight_bufs = 1 if single_buffer_weights else 2
    # Shrink the batch tile until the VMEM budget fits.
    while tm > granule and _vmem_estimate(tm, dim, D, mm_itemsize, out_itemsize,
                                          weight_bufs) > vmem_cap:
        tm = max(granule, _round_up(tm // 2, granule))
    # v7x megacore: ensure the "parallel" batch axis has >= 2 steps so both TCs get work.
    while pl.cdiv(B, tm) < 2 and tm > granule:
        tm = max(granule, _round_up(tm // 2, granule))

    est = _vmem_estimate(tm, dim, D, mm_itemsize, out_itemsize, weight_bufs)
    vmem_limit = int(min(max(int(est * 1.25), 32 * _MIB), vmem_cap))
    # TODO(synk): if the resident weights (~3*D^2*itemsize) no longer fit the per-core VMEM
    # budget (very large dim, esp. v7x's 64 MiB), add a D-tiled "arbitrary" grid axis that
    # streams W1/W2 with a pl.when-initialized VMEM accumulator instead of failing.

    cast = lambda x: x.astype(matmul_dtype)
    w1s_p = _pad_to(cast(w1s), (dim, D))                              # [dim, D]  (N padded)
    w1h_p = _pad_to(cast(w1h), (dim, D))                              # [dim, D]
    b1_p = _pad_to(b1.astype(jnp.float32).reshape(1, dim), (1, D))    # [1, D]  f32
    w2_p = _pad_to(cast(w2), (D, dim))                                # [D, dim] (K padded)
    b2_p = b2.astype(jnp.float32).reshape(1, dim)                     # [1, dim] f32

    grid = (pl.cdiv(B, tm),)
    resident = {"pipeline_mode": pl.Buffered(1)} if single_buffer_weights else {}

    act_spec = pl.BlockSpec((tm, dim), lambda i: (i, 0))              # streamed per grid step
    w1_spec = pl.BlockSpec((dim, D), lambda i: (0, 0), **resident)    # VMEM-resident
    b1_spec = pl.BlockSpec((1, D), lambda i: (0, 0), **resident)
    w2_spec = pl.BlockSpec((D, dim), lambda i: (0, 0), **resident)
    b2_spec = pl.BlockSpec((1, dim), lambda i: (0, 0), **resident)
    out_spec = pl.BlockSpec((tm, dim), lambda i: (i, 0))

    return pl.pallas_call(
        _transition_kernel,
        out_shape=jax.ShapeDtypeStruct((B, dim), out_dtype),
        grid=grid,
        in_specs=[act_spec, act_spec, w1_spec, w1_spec, b1_spec, w2_spec, b2_spec],
        out_specs=out_spec,
        compiler_params=pltpu.CompilerParams(
            dimension_semantics=("parallel",),   # shard batch tiles across TCs (v7x megacore)
            vmem_limit_bytes=vmem_limit,
        ),
    )(s_prev, h_prev, w1s_p, w1h_p, b1_p, w2_p, b2_p)


def transition_net(s_prev, h_prev, params, *, block_m=None, matmul_dtype=jnp.bfloat16,
                   single_buffer_weights=True):
    """s_prev, h_prev: [B, dim] float32. Returns [B, dim] in s_prev.dtype.

    block_m:      batch tile size (None -> 1024 bf16 / 512 f32, auto-shrunk for VMEM and
                  to guarantee >= 2 grid steps).
    matmul_dtype: MXU operand dtype (bfloat16 default; accumulation/bias/ReLU stay f32).
    """
    try:
        return _transition_net_impl(s_prev, h_prev, params, block_m=block_m,
                                    matmul_dtype=matmul_dtype,
                                    single_buffer_weights=single_buffer_weights)
    except Exception:
        if not single_buffer_weights:
            raise
        # Fallback in case pl.Buffered(1) single-buffering is not supported by this JAX build.
        return _transition_net_impl(s_prev, h_prev, params, block_m=block_m,
                                    matmul_dtype=matmul_dtype,
                                    single_buffer_weights=False)


def init_params(key, dim):
    """Deterministic init matching nn.Linear(dim*2, dim) / nn.Linear(dim, dim) shapes.

    Stored pre-transposed ([in, out]); W1 is split into its s/h halves so the concat
    never has to be materialized.
    """
    k1, k2, k3, k4 = jax.random.split(key, 4)
    bound1 = 1.0 / jnp.sqrt(2.0 * dim)
    bound2 = 1.0 / jnp.sqrt(1.0 * dim)
    w1_t = jax.random.uniform(k1, (2 * dim, dim), jnp.float32, -bound1, bound1)
    b1 = jax.random.uniform(k2, (1, dim), jnp.float32, -bound1, bound1)
    w2_t = jax.random.uniform(k3, (dim, dim), jnp.float32, -bound2, bound2)
    b2 = jax.random.uniform(k4, (1, dim), jnp.float32, -bound2, bound2)
    return (w1_t[:dim], w1_t[dim:], b1, w2_t, b2)


def transition_net_ref(s_prev, h_prev, params):
    """Pure-JAX reference mirroring the PyTorch forward exactly."""
    w1s, w1h, b1, w2, b2 = params
    x = jnp.concatenate([s_prev, h_prev], axis=-1)                       # torch.cat(..., -1)
    w1 = jnp.concatenate([w1s, w1h], axis=0)                             # [2*dim, dim]
    hid = jnp.maximum(jnp.dot(x, w1, precision=jax.lax.Precision.HIGHEST) + b1, 0.0)
    return jnp.dot(hid, w2, precision=jax.lax.Precision.HIGHEST) + b2


if __name__ == "__main__":
    dim = 32
    batch = 24   # not a multiple of the batch tile -> exercises the masked last block

    key = jax.random.PRNGKey(0)
    kp, ks, kh = jax.random.split(key, 3)
    params = init_params(kp, dim)
    s_prev = jax.random.normal(ks, (batch, dim), jnp.float32)
    h_prev = jax.random.normal(kh, (batch, dim), jnp.float32)

    ref = transition_net_ref(s_prev, h_prev, params)

    # f32-operand path with a small tile so multiple pipelined grid steps run.
    out_f32 = transition_net(s_prev, h_prev, params, block_m=8, matmul_dtype=jnp.float32)
    out_f32 = jax.block_until_ready(out_f32)
    assert out_f32.shape == (batch, dim)
    # Tolerance covers MXU f32 pass decomposition differences vs XLA's dot.
    assert jnp.allclose(out_f32, ref, atol=2e-2, rtol=2e-2), "f32 path mismatch vs reference"

    # Default path: bf16 MXU operands, f32 accumulation, auto tile sizing.
    out_bf16 = transition_net(s_prev, h_prev, params)
    out_bf16 = jax.block_until_ready(out_bf16)
    assert out_bf16.shape == (batch, dim)
    assert jnp.allclose(out_bf16, ref, atol=1e-1, rtol=1e-1), "bf16 path mismatch vs reference"

    print("KERNEL_OK")
</pallas_src>

<mosaic_0001>
module attributes {stable_mosaic.version = 11 : i64} {
  func.func @_transition_kernel(%arg0: i32, %arg1: memref<8x32xf32, #tpu.memory_space<vmem>>, %arg2: memref<8x32xf32, #tpu.memory_space<vmem>>, %arg3: memref<32x128xf32, #tpu.memory_space<vmem>>, %arg4: memref<32x128xf32, #tpu.memory_space<vmem>>, %arg5: memref<1x128xf32, #tpu.memory_space<vmem>>, %arg6: memref<128x32xf32, #tpu.memory_space<vmem>>, %arg7: memref<1x32xf32, #tpu.memory_space<vmem>>, %arg8: memref<8x32xf32, #tpu.memory_space<vmem>>) attributes {dimension_semantics = [#tpu.dimension_semantics<parallel>], iteration_bounds = array<i64: 3>, scalar_prefetch = 0 : i64, scratch_operands = 0 : i64, tpu.core_type = #tpu.core_type<tc>, window_params = [{transform_indices = @transform_0, window_bounds = array<i64: 8, 32>}, {transform_indices = @transform_1, window_bounds = array<i64: 8, 32>}, {pipeline_mode = #tpu.pipeline_mode<synchronous>, transform_indices = @transform_2, window_bounds = array<i64: 32, 128>}, {pipeline_mode = #tpu.pipeline_mode<synchronous>, transform_indices = @transform_3, window_bounds = array<i64: 32, 128>}, {pipeline_mode = #tpu.pipeline_mode<synchronous>, transform_indices = @transform_4, window_bounds = array<i64: 1, 128>}, {pipeline_mode = #tpu.pipeline_mode<synchronous>, transform_indices = @transform_5, window_bounds = array<i64: 128, 32>}, {pipeline_mode = #tpu.pipeline_mode<synchronous>, transform_indices = @transform_6, window_bounds = array<i64: 1, 32>}, {transform_indices = @transform_7, window_bounds = array<i64: 8, 32>}]} {
    %c0 = arith.constant 0 : index
    %c0_0 = arith.constant 0 : index
    %0 = vector.load %arg1[%c0, %c0_0] : memref<8x32xf32, #tpu.memory_space<vmem>>, vector<8x32xf32>
    %c0_1 = arith.constant 0 : index
    %c0_2 = arith.constant 0 : index
    %1 = vector.load %arg2[%c0_1, %c0_2] : memref<8x32xf32, #tpu.memory_space<vmem>>, vector<8x32xf32>
    %c0_3 = arith.constant 0 : index
    %c0_4 = arith.constant 0 : index
    %2 = vector.load %arg3[%c0_3, %c0_4] : memref<32x128xf32, #tpu.memory_space<vmem>>, vector<32x128xf32>
    %cst = arith.constant dense<0.000000e+00> : vector<8x128xf32>
    %3 = tpu.matmul %0, %2, %cst {dimension_numbers = #tpu.dot_dimension_numbers<[1], [0], [0], [1], [0, 0, 1, 1], [], []>} : vector<8x32xf32>, vector<32x128xf32>, vector<8x128xf32> -> vector<8x128xf32>
    %c0_5 = arith.constant 0 : index
    %c0_6 = arith.constant 0 : index
    %4 = vector.load %arg4[%c0_5, %c0_6] : memref<32x128xf32, #tpu.memory_space<vmem>>, vector<32x128xf32>
    %cst_7 = arith.constant dense<0.000000e+00> : vector<8x128xf32>
    %5 = tpu.matmul %1, %4, %cst_7 {dimension_numbers = #tpu.dot_dimension_numbers<[1], [0], [0], [1], [0, 0, 1, 1], [], []>} : vector<8x32xf32>, vector<32x128xf32>, vector<8x128xf32> -> vector<8x128xf32>
    %6 = arith.addf %3, %5 : vector<8x128xf32>
    %c0_8 = arith.constant 0 : index
    %c0_9 = arith.constant 0 : index
    %7 = vector.load %arg5[%c0_8, %c0_9] : memref<1x128xf32, #tpu.memory_space<vmem>>, vector<1x128xf32>
    %8 = vector.broadcast %7 : vector<1x128xf32> to vector<8x128xf32>
    %9 = arith.addf %6, %8 : vector<8x128xf32>
    %cst_10 = arith.constant 0.000000e+00 : f32
    %10 = vector.broadcast %cst_10 : f32 to vector<8x128xf32>
    %11 = arith.maximumf %9, %10 : vector<8x128xf32>
    %c0_11 = arith.constant 0 : index
    %c0_12 = arith.constant 0 : index
    %12 = vector.load %arg6[%c0_11, %c0_12] : memref<128x32xf32, #tpu.memory_space<vmem>>, vector<128x32xf32>
    %cst_13 = arith.constant dense<0.000000e+00> : vector<8x32xf32>
    %13 = tpu.matmul %11, %12, %cst_13 {dimension_numbers = #tpu.dot_dimension_numbers<[1], [0], [0], [1], [0, 0, 1, 1], [], []>} : vector<8x128xf32>, vector<128x32xf32>, vector<8x32xf32> -> vector<8x32xf32>
    %c0_14 = arith.constant 0 : index
    %c0_15 = arith.constant 0 : index
    %14 = vector.load %arg7[%c0_14, %c0_15] : memref<1x32xf32, #tpu.memory_space<vmem>>, vector<1x32xf32>
    %15 = vector.broadcast %14 : vector<1x32xf32> to vector<8x32xf32>
    %16 = arith.addf %13, %15 : vector<8x32xf32>
    %c0_16 = arith.constant 0 : index
    %c0_17 = arith.constant 0 : index
    %17 = vector.load %arg8[%c0_16, %c0_17] : memref<8x32xf32, #tpu.memory_space<vmem>>, vector<8x32xf32>
    tpu.vector_store %arg8[%c0_16, %c0_17], %16 {strides = array<i32>} : memref<8x32xf32, #tpu.memory_space<vmem>>, vector<8x32xf32>,
    return
  }
  func.func @transform_0(%arg0: i32) -> (i32, i32) {
    %c0_i32 = arith.constant 0 : i32
    %c0_i32_0 = arith.constant 0 : i32
    return %arg0, %c0_i32 : i32, i32
  }
  func.func @transform_1(%arg0: i32) -> (i32, i32) {
    %c0_i32 = arith.constant 0 : i32
    %c0_i32_0 = arith.constant 0 : i32
    return %arg0, %c0_i32 : i32, i32
  }
  func.func @transform_2(%arg0: i32) -> (i32, i32) {
    %c0_i32 = arith.constant 0 : i32
    %c0_i32_0 = arith.constant 0 : i32
    %c0_i32_1 = arith.constant 0 : i32
    return %c0_i32, %c0_i32_0 : i32, i32
  }
  func.func @transform_3(%arg0: i32) -> (i32, i32) {
    %c0_i32 = arith.constant 0 : i32
    %c0_i32_0 = arith.constant 0 : i32
    %c0_i32_1 = arith.constant 0 : i32
    return %c0_i32, %c0_i32_0 : i32, i32
  }
  func.func @transform_4(%arg0: i32) -> (i32, i32) {
    %c0_i32 = arith.constant 0 : i32
    %c0_i32_0 = arith.constant 0 : i32
    %c0_i32_1 = arith.constant 0 : i32
    return %c0_i32, %c0_i32_0 : i32, i32
  }
  func.func @transform_5(%arg0: i32) -> (i32, i32) {
    %c0_i32 = arith.constant 0 : i32
    %c0_i32_0 = arith.constant 0 : i32
    %c0_i32_1 = arith.constant 0 : i32
    return %c0_i32, %c0_i32_0 : i32, i32
  }
  func.func @transform_6(%arg0: i32) -> (i32, i32) {
    %c0_i32 = arith.constant 0 : i32
    %c0_i32_0 = arith.constant 0 : i32
    %c0_i32_1 = arith.constant 0 : i32
    return %c0_i32, %c0_i32_0 : i32, i32
  }
  func.func @transform_7(%arg0: i32) -> (i32, i32) {
    %c0_i32 = arith.constant 0 : i32
    %c0_i32_0 = arith.constant 0 : i32
    return %arg0, %c0_i32 : i32, i32
  }
}

module attributes {stable_mosaic.version = 11 : i64} {
  func.func @_transition_kernel(%arg0: i32, %arg1: memref<8x32xf32, #tpu.memory_space<vmem>>, %arg2: memref<8x32xf32, #tpu.memory_space<vmem>>, %arg3: memref<32x128xf32, #tpu.memory_space<vmem>>, %arg4: memref<32x128xf32, #tpu.memory_space<vmem>>, %arg5: memref<1x128xf32, #tpu.memory_space<vmem>>, %arg6: memref<128x32xf32, #tpu.memory_space<vmem>>, %arg7: memref<1x32xf32, #tpu.memory_space<vmem>>, %arg8: memref<8x32xf32, #tpu.memory_space<vmem>>) attributes {dimension_semantics = [#tpu.dimension_semantics<parallel>], iteration_bounds = array<i64: 3>, scalar_prefetch = 0 : i64, scratch_operands = 0 : i64, tpu.core_type = #tpu.core_type<tc>, window_params = [{transform_indices = @transform_0, window_bounds = array<i64: 8, 32>}, {transform_indices = @transform_1, window_bounds = array<i64: 8, 32>}, {pipeline_mode = #tpu.pipeline_mode<synchronous>, transform_indices = @transform_2, window_bounds = array<i64: 32, 128>}, {pipeline_mode = #tpu.pipeline_mode<synchronous>, transform_indices = @transform_3, window_bounds = array<i64: 32, 128>}, {pipeline_mode = #tpu.pipeline_mode<synchronous>, transform_indices = @transform_4, window_bounds = array<i64: 1, 128>}, {pipeline_mode = #tpu.pipeline_mode<synchronous>, transform_indices = @transform_5, window_bounds = array<i64: 128, 32>}, {pipeline_mode = #tpu.pipeline_mode<synchronous>, transform_indices = @transform_6, window_bounds = array<i64: 1, 32>}, {transform_indices = @transform_7, window_bounds = array<i64: 8, 32>}]} {
    %c0 = arith.constant 0 : index
    %c0_0 = arith.constant 0 : index
    %0 = vector.load %arg1[%c0, %c0_0] : memref<8x32xf32, #tpu.memory_space<vmem>>, vector<8x32xf32>
    %c0_1 = arith.constant 0 : index
    %c0_2 = arith.constant 0 : index
    %1 = vector.load %arg2[%c0_1, %c0_2] : memref<8x32xf32, #tpu.memory_space<vmem>>, vector<8x32xf32>
    %c0_3 = arith.constant 0 : index
    %c0_4 = arith.constant 0 : index
    %2 = vector.load %arg3[%c0_3, %c0_4] : memref<32x128xf32, #tpu.memory_space<vmem>>, vector<32x128xf32>
    %cst = arith.constant dense<0.000000e+00> : vector<8x128xf32>
    %3 = tpu.matmul %0, %2, %cst {dimension_numbers = #tpu.dot_dimension_numbers<[1], [0], [0], [1], [0, 0, 1, 1], [], []>} : vector<8x32xf32>, vector<32x128xf32>, vector<8x128xf32> -> vector<8x128xf32>
    %c0_5 = arith.constant 0 : index
    %c0_6 = arith.constant 0 : index
    %4 = vector.load %arg4[%c0_5, %c0_6] : memref<32x128xf32, #tpu.memory_space<vmem>>, vector<32x128xf32>
    %cst_7 = arith.constant dense<0.000000e+00> : vector<8x128xf32>
    %5 = tpu.matmul %1, %4, %cst_7 {dimension_numbers = #tpu.dot_dimension_numbers<[1], [0], [0], [1], [0, 0, 1, 1], [], []>} : vector<8x32xf32>, vector<32x128xf32>, vector<8x128xf32> -> vector<8x128xf32>
    %6 = arith.addf %3, %5 : vector<8x128xf32>
    %c0_8 = arith.constant 0 : index
    %c0_9 = arith.constant 0 : index
    %7 = vector.load %arg5[%c0_8, %c0_9] : memref<1x128xf32, #tpu.memory_space<vmem>>, vector<1x128xf32>
    %8 = vector.broadcast %7 : vector<1x128xf32> to vector<8x128xf32>
    %9 = arith.addf %6, %8 : vector<8x128xf32>
    %cst_10 = arith.constant 0.000000e+00 : f32
    %10 = vector.broadcast %cst_10 : f32 to vector<8x128xf32>
    %11 = arith.maximumf %9, %10 : vector<8x128xf32>
    %c0_11 = arith.constant 0 : index
    %c0_12 = arith.constant 0 : index
    %12 = vector.load %arg6[%c0_11, %c0_12] : memref<128x32xf32, #tpu.memory_space<vmem>>, vector<128x32xf32>
    %cst_13 = arith.constant dense<0.000000e+00> : vector<8x32xf32>
    %13 = tpu.matmul %11, %12, %cst_13 {dimension_numbers = #tpu.dot_dimension_numbers<[1], [0], [0], [1], [0, 0, 1, 1], [], []>} : vector<8x128xf32>, vector<128x32xf32>, vector<8x32xf32> -> vector<8x32xf32>
    %c0_14 = arith.constant 0 : index
    %c0_15 = arith.constant 0 : index
    %14 = vector.load %arg7[%c0_14, %c0_15] : memref<1x32xf32, #tpu.memory_space<vmem>>, vector<1x32xf32>
    %15 = vector.broadcast %14 : vector<1x32xf32> to vector<8x32xf32>
    %16 = arith.addf %13, %15 : vector<8x32xf32>
    %c0_16 = arith.constant 0 : index
    %c0_17 = arith.constant 0 : index
    %17 = vector.load %arg8[%c0_16, %c0_17] : memref<8x32xf32, #tpu.memory_space<vmem>>, vector<8x32xf32>
    tpu.vector_store %arg8[%c0_16, %c0_17], %16 {strides = array<i32>} : memref<8x32xf32, #tpu.memory_space<vmem>>, vector<8x32xf32>,
    return
  }
  func.func @transform_0(%arg0: i32) -> (i32, i32) {
    %c0_i32 = arith.constant 0 : i32
    %c0_i32_0 = arith.constant 0 : i32
    return %arg0, %c0_i32 : i32, i32
  }
  func.func @transform_1(%arg0: i32) -> (i32, i32) {
    %c0_i32 = arith.constant 0 : i32
    %c0_i32_0 = arith.constant 0 : i32
    return %arg0, %c0_i32 : i32, i32
  }
  func.func @transform_2(%arg0: i32) -> (i32, i32) {
    %c0_i32 = arith.constant 0 : i32
    %c0_i32_0 = arith.constant 0 : i32
    %c0_i32_1 = arith.constant 0 : i32
    return %c0_i32, %c0_i32_0 : i32, i32
  }
  func.func @transform_3(%arg0: i32) -> (i32, i32) {
    %c0_i32 = arith.constant 0 : i32
    %c0_i32_0 = arith.constant 0 : i32
    %c0_i32_1 = arith.constant 0 : i32
    return %c0_i32, %c0_i32_0 : i32, i32
  }
  func.func @transform_4(%arg0: i32) -> (i32, i32) {
    %c0_i32 = arith.constant 0 : i32
    %c0_i32_0 = arith.constant 0 : i32
    %c0_i32_1 = arith.constant 0 : i32
    return %c0_i32, %c0_i32_0 : i32, i32
  }
  func.func @transform_5(%arg0: i32) -> (i32, i32) {
    %c0_i32 = arith.constant 0 : i32
    %c0_i32_0 = arith.constant 0 : i32
    %c0_i32_1 = arith.constant 0 : i32
    return %c0_i32, %c0_i32_0 : i32, i32
  }
  func.func @transform_6(%arg0: i32) -> (i32, i32) {
    %c0_i32 = arith.constant 0 : i32
    %c0_i32_0 = arith.constant 0 : i32
    %c0_i32_1 = arith.constant 0 : i32
    return %c0_i32, %c0_i32_0 : i32, i32
  }
  func.func @transform_7(%arg0: i32) -> (i32, i32) {
    %c0_i32 = arith.constant 0 : i32
    %c0_i32_0 = arith.constant 0 : i32
    return %arg0, %c0_i32 : i32, i32
  }
}

</mosaic_0001>

<llo_original>
// kernel: tpu_custom_call.1
$region0: #{tpu_custom_call.1}
  #allocation0 [shape = 'u32[]', space=smem, size = 0x4, offset = 0x4, fixed_abs, tag = 'smem constant byte address 0x4 - core index']
  #allocation1 [shape = 'u32[144,128]{1,0:T(1,128)}', space=vmem, size = 0x12000, scoped, tag = 'internal scratch']
  %s0 = inlined_call_operand.vmem [shape: f32[24,32], index: 0, kind: input, shape index: {}]
  %s1 = inlined_call_operand.vmem [shape: f32[24,32], index: 1, kind: input, shape index: {}]
  %s2 = inlined_call_operand.vmem [shape: f32[32,128], index: 2, kind: input, shape index: {}]
  %s3 = inlined_call_operand.vmem [shape: f32[32,128], index: 3, kind: input, shape index: {}]
  %s4 = inlined_call_operand.vmem [shape: f32[1,128], index: 4, kind: input, shape index: {}]
  %s5 = inlined_call_operand.vmem [shape: f32[128,32], index: 5, kind: input, shape index: {}]
  %s6 = inlined_call_operand.vmem [shape: f32[1,32], index: 6, kind: input, shape index: {}]
  %s7 = inlined_call_operand.hbm [shape: f32[24,32], index: 7, kind: output, shape index: {}]
  %s8 = sld [smem:[#allocation0]]
  $region61: #{tpu_custom_call.1} parent=0
    _
  %s10 = ssub.s32 1, %s8
  %s11 = scalar_select 0, %s10, %s8
  $region1: #{tpu_custom_call.1} parent=0
    #allocation2 [shape = 'u8[8192]{0}', space=vmem, size = 0x2000, scoped, tag = 'output window, operand 0']
    #allocation3 [shape = 's32[2]{0}', space=sflag, size = 0x8, scoped, tag = 'scoped memory for tpu_custom_call.1']
    %12 = vsyncpa [#allocation3], 0
    %s13 = scalar_lea.sflag [#allocation3], 1
    %14 = vsyncpa %s13, 0
    loop: start=0, step=1, limit=5
    $region2: #{tpu_custom_call.1} parent=1 // loop_pre_header
      _
    $region3: #{tpu_custom_call.1} parent=1 // loop_header
      %s16 = sphi 0, %s20
      %p17 = scmp.ge.s32.totalorder %s16, 5
      %s26 = sphi 0, %s28
      %s29 = sphi 0, %s26
      %s30 = sphi 0, %s29
      %s46 = sphi 0, %s30
      %s52 = sphi 0, %s54
      %s55 = sphi 0, %s52
      %s56 = sphi 0, %s55
      %s72 = sphi 0, %s56
      %s76 = sphi 0, %s76
      %s78 = sphi 0, %s76
      %s79 = sphi 0, %s78
      %s93 = sphi 0, %s79
      %s97 = sphi 0, %s97
      %s99 = sphi 0, %s97
      %s100 = sphi 0, %s99
      %s114 = sphi 0, %s100
      %s118 = sphi 0, %s118
      %s120 = sphi 0, %s118
      %s121 = sphi 0, %s120
      %s135 = sphi 0, %s121
      %s139 = sphi 0, %s139
      %s141 = sphi 0, %s139
      %s142 = sphi 0, %s141
      %s156 = sphi 0, %s142
      %s160 = sphi 0, %s160
      %s162 = sphi 0, %s160
      %s163 = sphi 0, %s162
      %s177 = sphi 0, %s163
      %s183 = sphi 0, %s185
      %s186 = sphi 0, %s183
      %s187 = sphi 0, %s186
      %s203 = sphi 0, %s187
    $region4: #{tpu_custom_call.1} parent=1 // loop_header_branch
      %19 = sbr.rel (%p17) target = $region8
    $region5: #{tpu_custom_call.1} parent=1 // loop_body
      %s21 = ssub.s32 %s16, 1
      %s22 = ssub.s32 %s16, 2
      %s23 = sadd.s32 %s16, 1
      %s24 = ssub.s32 %s16, %s23
      %p25 = scmp.eq.s32.totalorder %s24, 0
      %s27 = sadd.s32 %s26, 1
      %s28 = scalar_select %p25, %s26, %s27
      %p31 = pneg %p25
      %p32 = scmp.eq.s32.totalorder %s16, 2
      %p33 = por %p31, %p32
      %p34 = scmp.ne.s32.totalorder %s26, %s29
      %p35 = scmp.eq.s32.totalorder %s16, 0
      %p36 = por %p34, %p35
      %p37 = scmp.ne.s32.totalorder %s26, %s29
      %p38 = scmp.eq.s32.totalorder %s21, 2
      %p39 = por %p37, %p38
      %p40 = scmp.ne.s32.totalorder %s29, %s30
      %p41 = scmp.eq.s32.totalorder %s21, 0
      %p42 = por %p40, %p41
      %p43 = scmp.ne.s32.totalorder %s29, %s30
      %p44 = scmp.eq.s32.totalorder %s22, 2
      %p45 = por %p43, %p44
      %p47 = scmp.ne.s32.totalorder %s30, %s46
      %p48 = scmp.eq.s32.totalorder %s22, 0
      %p49 = por %p47, %p48
      %s50 = ssub.s32 %s16, %s23
      %p51 = scmp.eq.s32.totalorder %s50, 0
      %s53 = sadd.s32 %s52, 1
      %s54 = scalar_select %p51, %s52, %s53
      %p57 = pneg %p51
      %p58 = scmp.eq.s32.totalorder %s16, 2
      %p59 = por %p57, %p58
      %p60 = scmp.ne.s32.totalorder %s52, %s55
      %p61 = scmp.eq.s32.totalorder %s16, 0
      %p62 = por %p60, %p61
      %p63 = scmp.ne.s32.totalorder %s52, %s55
      %p64 = scmp.eq.s32.totalorder %s21, 2
      %p65 = por %p63, %p64
      %p66 = scmp.ne.s32.totalorder %s55, %s56
      %p67 = scmp.eq.s32.totalorder %s21, 0
      %p68 = por %p66, %p67
      %p69 = scmp.ne.s32.totalorder %s55, %s56
      %p70 = scmp.eq.s32.totalorder %s22, 2
      %p71 = por %p69, %p70
      %p73 = scmp.ne.s32.totalorder %s56, %s72
      %p74 = scmp.eq.s32.totalorder %s22, 0
      %p75 = por %p73, %p74
      %s77 = sadd.s32 %s76, 1
      %p80 = scmp.eq.s32.totalorder %s16, 2
      %p81 = scmp.ne.s32.totalorder %s76, %s78
      %p82 = scmp.eq.s32.totalorder %s16, 0
      %p83 = por %p81, %p82
      %p84 = scmp.ne.s32.totalorder %s76, %s78
      %p85 = scmp.eq.s32.totalorder %s21, 2
      %p86 = por %p84, %p85
      %p87 = scmp.ne.s32.totalorder %s78, %s79
      %p88 = scmp.eq.s32.totalorder %s21, 0
      %p89 = por %p87, %p88
      %p90 = scmp.ne.s32.totalorder %s78, %s79
      %p91 = scmp.eq.s32.totalorder %s22, 2
      %p92 = por %p90, %p91
      %p94 = scmp.ne.s32.totalorder %s79, %s93
      %p95 = scmp.eq.s32.totalorder %s22, 0
      %p96 = por %p94, %p95
      %s98 = sadd.s32 %s97, 1
      %p101 = scmp.eq.s32.totalorder %s16, 2
      %p102 = scmp.ne.s32.totalorder %s97, %s99
      %p103 = scmp.eq.s32.totalorder %s16, 0
      %p104 = por %p102, %p103
      %p105 = scmp.ne.s32.totalorder %s97, %s99
      %p106 = scmp.eq.s32.totalorder %s21, 2
      %p107 = por %p105, %p106
      %p108 = scmp.ne.s32.totalorder %s99, %s100
      %p109 = scmp.eq.s32.totalorder %s21, 0
      %p110 = por %p108, %p109
      %p111 = scmp.ne.s32.totalorder %s99, %s100
      %p112 = scmp.eq.s32.totalorder %s22, 2
      %p113 = por %p111, %p112
      %p115 = scmp.ne.s32.totalorder %s100, %s114
      %p116 = scmp.eq.s32.totalorder %s22, 0
      %p117 = por %p115, %p116
      %s119 = sadd.s32 %s118, 1
      %p122 = scmp.eq.s32.totalorder %s16, 2
      %p123 = scmp.ne.s32.totalorder %s118, %s120
      %p124 = scmp.eq.s32.totalorder %s16, 0
      %p125 = por %p123, %p124
      %p126 = scmp.ne.s32.totalorder %s118, %s120
      %p127 = scmp.eq.s32.totalorder %s21, 2
      %p128 = por %p126, %p127
      %p129 = scmp.ne.s32.totalorder %s120, %s121
      %p130 = scmp.eq.s32.totalorder %s21, 0
      %p131 = por %p129, %p130
      %p132 = scmp.ne.s32.totalorder %s120, %s121
      %p133 = scmp.eq.s32.totalorder %s22, 2
      %p134 = por %p132, %p133
      %p136 = scmp.ne.s32.totalorder %s121, %s135
      %p137 = scmp.eq.s32.totalorder %s22, 0
      %p138 = por %p136, %p137
      %s140 = sadd.s32 %s139, 1
      %p143 = scmp.eq.s32.totalorder %s16, 2
      %p144 = scmp.ne.s32.totalorder %s139, %s141
      %p145 = scmp.eq.s32.totalorder %s16, 0
      %p146 = por %p144, %p145
      %p147 = scmp.ne.s32.totalorder %s139, %s141
      %p148 = scmp.eq.s32.totalorder %s21, 2
      %p149 = por %p147, %p148
      %p150 = scmp.ne.s32.totalorder %s141, %s142
      %p151 = scmp.eq.s32.totalorder %s21, 0
      %p152 = por %p150, %p151
      %p153 = scmp.ne.s32.totalorder %s141, %s142
      %p154 = scmp.eq.s32.totalorder %s22, 2
      %p155 = por %p153, %p154
      %p157 = scmp.ne.s32.totalorder %s142, %s156
      %p158 = scmp.eq.s32.totalorder %s22, 0
      %p159 = por %p157, %p158
      %s161 = sadd.s32 %s160, 1
      %p164 = scmp.eq.s32.totalorder %s16, 2
      %p165 = scmp.ne.s32.totalorder %s160, %s162
      %p166 = scmp.eq.s32.totalorder %s16, 0
      %p167 = por %p165, %p166
      %p168 = scmp.ne.s32.totalorder %s160, %s162
      %p169 = scmp.eq.s32.totalorder %s21, 2
      %p170 = por %p168, %p169
      %p171 = scmp.ne.s32.totalorder %s162, %s163
      %p172 = scmp.eq.s32.totalorder %s21, 0
      %p173 = por %p171, %p172
      %p174 = scmp.ne.s32.totalorder %s162, %s163
      %p175 = scmp.eq.s32.totalorder %s22, 2
      %p176 = por %p174, %p175
      %p178 = scmp.ne.s32.totalorder %s163, %s177
      %p179 = scmp.eq.s32.totalorder %s22, 0
      %p180 = por %p178, %p179
      %s181 = ssub.s32 %s16, %s23
      %p182 = scmp.eq.s32.totalorder %s181, 0
      %s184 = sadd.s32 %s183, 1
      %s185 = scalar_select %p182, %s183, %s184
      %p188 = pneg %p182
      %p189 = scmp.eq.s32.totalorder %s16, 2
      %p190 = por %p188, %p189
      %p191 = scmp.ne.s32.totalorder %s183, %s186
      %p192 = scmp.eq.s32.totalorder %s16, 0
      %p193 = por %p191, %p192
      %p194 = scmp.ne.s32.totalorder %s183, %s186
      %p195 = scmp.eq.s32.totalorder %s21, 2
      %p196 = por %p194, %p195
      %p197 = scmp.ne.s32.totalorder %s186, %s187
      %p198 = scmp.eq.s32.totalorder %s21, 0
      %p199 = por %p197, %p198
      %p200 = scmp.ne.s32.totalorder %s186, %s187
      %p201 = scmp.eq.s32.totalorder %s22, 2
      %p202 = por %p200, %p201
      %p204 = scmp.ne.s32.totalorder %s187, %s203
      %p205 = scmp.eq.s32.totalorder %s22, 0
      %p206 = por %p204, %p205
      %p207 = scmp.le.s32.totalorder 1, %s16
      %p208 = scmp.lt.s32.totalorder %s16, 4
      %p209 = pnand %p207, %p208
      %p210 = pneg %p209
      // Predicated region
      $region9: #{tpu_custom_call.1} parent=5 // pred_check
        _
      $region10: #{tpu_custom_call.1} parent=5 // pred_check_branch
        %212 = sbr.rel (%p209) target = $region12
      $region11: #{tpu_custom_call.1} parent=5 // pred_region
        %s213 = ssub.s32 %s16, 1
        // Predicated region
        $region13: #{tpu_custom_call.1} parent=11 // pred_check
          %p214 = pneg %p89
        $region14: #{tpu_custom_call.1} parent=11 // pred_check_branch
          %216 = sbr.rel (%p214) target = $region16
        $region15: #{tpu_custom_call.1} parent=11 // pred_region
          _
        $region16: #{tpu_custom_call.1} parent=11 // pred_fallthru
          _
        // Predicated region
        $region17: #{tpu_custom_call.1} parent=11 // pred_check
          %p217 = pneg %p110
        $region18: #{tpu_custom_call.1} parent=11 // pred_check_branch
          %219 = sbr.rel (%p217) target = $region20
        $region19: #{tpu_custom_call.1} parent=11 // pred_region
          _
        $region20: #{tpu_custom_call.1} parent=11 // pred_fallthru
          _
        // Predicated region
        $region21: #{tpu_custom_call.1} parent=11 // pred_check
          %p220 = pneg %p131
        $region22: #{tpu_custom_call.1} parent=11 // pred_check_branch
          %222 = sbr.rel (%p220) target = $region24
        $region23: #{tpu_custom_call.1} parent=11 // pred_region
          _
        $region24: #{tpu_custom_call.1} parent=11 // pred_fallthru
          _
        // Predicated region
        $region25: #{tpu_custom_call.1} parent=11 // pred_check
          %p223 = pneg %p152
        $region26: #{tpu_custom_call.1} parent=11 // pred_check_branch
          %225 = sbr.rel (%p223) target = $region28
        $region27: #{tpu_custom_call.1} parent=11 // pred_region
          _
        $region28: #{tpu_custom_call.1} parent=11 // pred_fallthru
          _
        // Predicated region
        $region29: #{tpu_custom_call.1} parent=11 // pred_check
          %p226 = pneg %p173
        $region30: #{tpu_custom_call.1} parent=11 // pred_check_branch
          %228 = sbr.rel (%p226) target = $region32
        $region31: #{tpu_custom_call.1} parent=11 // pred_region
          _
        $region32: #{tpu_custom_call.1} parent=11 // pred_fallthru
          _
      $region12: #{tpu_custom_call.1} parent=5 // pred_fallthru
        _
      %p229 = scmp.lt.s32.totalorder %s16, 3
      // Predicated region
      $region33: #{tpu_custom_call.1} parent=5 // pred_check
        %p230 = pneg %p229
      $region34: #{tpu_custom_call.1} parent=5 // pred_check_branch
        %232 = sbr.rel (%p230) target = $region36
      $region35: #{tpu_custom_call.1} parent=5 // pred_region
        // Predicated region
        $region37: #{tpu_custom_call.1} parent=35 // pred_check
          %p233 = pneg %p36
        $region38: #{tpu_custom_call.1} parent=35 // pred_check_branch
          %235 = sbr.rel (%p233) target = $region40
        $region39: #{tpu_custom_call.1} parent=35 // pred_region
          %p236 = scmp.lt.s32.totalorder %s16, 2
          %s237 = scalar_select %p236, %s16, 2
          %s238 = smul.addr %s237, 8
          %s239 = scalar_lea.vmem %s0, %s238
        $region40: #{tpu_custom_call.1} parent=35 // pred_fallthru
          _
        // Predicated region
        $region41: #{tpu_custom_call.1} parent=35 // pred_check
          %p240 = pneg %p62
        $region42: #{tpu_custom_call.1} parent=35 // pred_check_branch
          %242 = sbr.rel (%p240) target = $region44
        $region43: #{tpu_custom_call.1} parent=35 // pred_region
          %p243 = scmp.lt.s32.totalorder %s16, 2
          %s244 = scalar_select %p243, %s16, 2
          %s245 = smul.addr %s244, 8
          %s246 = scalar_lea.vmem %s1, %s245
        $region44: #{tpu_custom_call.1} parent=35 // pred_fallthru
          _
      $region36: #{tpu_custom_call.1} parent=5 // pred_fallthru
        _
      %p247 = scmp.le.s32.totalorder 1, %s16
      %p248 = scmp.lt.s32.totalorder %s16, 4
      %p249 = pnand %p247, %p248
      %p250 = pneg %p249
      // Predicated region
      $region45: #{tpu_custom_call.1} parent=5 // pred_check
        _
      $region46: #{tpu_custom_call.1} parent=5 // pred_check_branch
        %252 = sbr.rel (%p249) target = $region48
      $region47: #{tpu_custom_call.1} parent=5 // pred_region
        %s253 = ssub.s32 %s16, 1
        %p254 = scmp.lt.s32.totalorder %s21, 2
        %s255 = scalar_select %p254, %s21, 2
        %s256 = smul.addr %s255, 8
        %s257 = scalar_lea.vmem %s0, %s256
        %p258 = pneg %p42
        %p259 = pneg %p39
        %p260 = scmp.lt.s32.totalorder %s21, 2
        %s261 = scalar_select %p260, %s21, 2
        %s262 = smul.addr %s261, 8
        %s263 = scalar_lea.vmem %s1, %s262
        %p264 = pneg %p68
        %p265 = pneg %p65
        %p266 = pneg %p89
        %p267 = pneg %p86
        %p268 = pneg %p110
        %p269 = pneg %p107
        %p270 = pneg %p131
        %p271 = pneg %p128
        %p272 = pneg %p152
        %p273 = pneg %p149
        %p274 = pneg %p173
        %p275 = pneg %p170
        %p276 = pneg %p199
        %p277 = pneg %p196
        %s278 = sand.u32 %s186, 1
        %s279 = scalar_lea.sflag [#allocation3], %s278
        %s280 = sand.u32 %s186, 1
        %s281 = smul.addr %s280, 8
        %s282 = scalar_lea.vmem [#allocation2], %s281
        %p283 = scmp.lt.s32.totalorder %s21, 2
        %s284 = scalar_select %p283, %s21, 2
        %s285 = smul.addr %s284, 8
        %s286 = scalar_lea.vmem %s0, %s285
        %p287 = scmp.lt.s32.totalorder %s21, 2
        %s288 = scalar_select %p287, %s21, 2
        %s289 = smul.addr %s288, 8
        %s290 = scalar_lea.vmem %s1, %s289
        %v291 = vld [vmem:[%s286] sm:$0xff]
        %v292 = vld [vmem:[%s290] sm:$0xff]
        %v293 = vld [vmem:[%s2] sm:$0xff]
        %v294 = vld [vmem:[%s2 + $0x8] sm:$0xff]
        %v295 = vld [vmem:[%s2 + $0x10] sm:$0xff]
        %v296 = vld [vmem:[%s2 + $0x18] sm:$0xff]
        %v297 = vld [vmem:[%s3] sm:$0xff]
        %v298 = vld [vmem:[%s3 + $0x8] sm:$0xff]
        %v299 = vld [vmem:[%s3 + $0x10] sm:$0xff]
        %v300 = vld [vmem:[%s3 + $0x18] sm:$0xff]
        %vm301 = vcmask 261120
        %v303 = vsel %vm301, %v292, 0
        %305 = vmatprep.subr.mxu0 0.0
        %306 = vmatpush1.msra.mxu0 0.0
        %307 = vmatprep.subr.mxu0 0.0
        %308 = vmatpush1.msra.mxu0 0.0
        %309 = vmatprep.subr.mxu0 0.0
        %310 = vmatpush1.msra.mxu0 0.0
        %311 = vmatprep.subr.mxu0 0.0
        %312 = vmatpush1.msra.mxu0 0.0
        %313 = vmatprep.subr.mxu0 0.0
        %314 = vmatpush1.msra.mxu0 0.0
        %315 = vmatprep.subr.mxu0 0.0
        %316 = vmatpush1.msra.mxu0 0.0
        %317 = vmatprep.subr.mxu0 0.0
        %318 = vmatpush1.msra.mxu0 0.0
        %319 = vmatprep.subr.mxu0 0.0
        %320 = vmatpush1.msra.mxu0 0.0
        %321 = vmatprep.subr.mxu0 0.0
        %322 = vmatpush1.msra.mxu0 0.0
        %323 = vmatprep.subr.mxu0 0.0
        %324 = vmatpush1.msra.mxu0 0.0
        %325 = vmatprep.subr.mxu0 0.0
        %326 = vmatpush1.msra.mxu0 0.0
        %327 = vmatprep.subr.mxu0 0.0
        %328 = vmatpush1.msra.mxu0 0.0
        %329 = vmatprep.subr.mxu0 0.0
        %330 = vmatpush1.msra.mxu0 %v300
        %331 = vmatprep.subr.mxu0 0.0
        %332 = vmatpush1.msra.mxu0 %v299
        %333 = vmatprep.subr.mxu0 0.0
        %334 = vmatpush1.msra.mxu0 %v298
        %335 = vmatprep.subr.mxu0 0.0
        %336 = vmatpush1.msra.mxu0 %v297
        %337 = vmatprep.subr.mxu0 0.0
        %338 = vmatpush2.msra.mxu0 0.0
        %339 = vmatprep.subr.mxu0 0.0
        %340 = vmatpush2.msra.mxu0 0.0
        %341 = vmatprep.subr.mxu0 0.0
        %342 = vmatpush2.msra.mxu0 0.0
        %343 = vmatprep.subr.mxu0 0.0
        %344 = vmatpush2.msra.mxu0 0.0
        %345 = vmatprep.subr.mxu0 0.0
        %346 = vmatpush2.msra.mxu0 0.0
        %347 = vmatprep.subr.mxu0 0.0
        %348 = vmatpush2.msra.mxu0 0.0
        %349 = vmatprep.subr.mxu0 0.0
        %350 = vmatpush2.msra.mxu0 0.0
        %351 = vmatprep.subr.mxu0 0.0
        %352 = vmatpush2.msra.mxu0 0.0
        %353 = vmatprep.subr.mxu0 0.0
        %354 = vmatpush2.msra.mxu0 0.0
        %355 = vmatprep.subr.mxu0 0.0
        %356 = vmatpush2.msra.mxu0 0.0
        %357 = vmatprep.subr.mxu0 0.0
        %358 = vmatpush2.msra.mxu0 0.0
        %359 = vmatprep.subr.mxu0 0.0
        %360 = vmatpush2.msra.mxu0 0.0
        %361 = vmatprep.subr.mxu0 0.0
        %362 = vmatpush2.msra.mxu0 0.0
        %363 = vmatprep.subr.mxu0 0.0
        %364 = vmatpush2.msra.mxu0 0.0
        %365 = vmatprep.subr.mxu0 0.0
        %366 = vmatpush2.msra.mxu0 0.0
        %367 = vmatprep.subr.mxu0 0.0
        %368 = vmatpush2.msra.mxu0 0.0
        %369 = vmatprep.mubr.f32.mxu0 0.0
        %370 = vmatmul.mubr.f32.gmra.mxu0 %v303
        %v371 = vpop.f32.mrf.mxu0
        %v372 = vadd.f32 0.0, %v371
        %v373 = vpop.f32.mrf.mxu0
        %374 = vdwg.mxu0
        %v376 = vsel %vm301, %v291, 0
        %378 = vmatprep.subr.mxu0 0.0
        %379 = vmatpush1.msra.mxu0 0.0
        %380 = vmatprep.subr.mxu0 0.0
        %381 = vmatpush1.msra.mxu0 0.0
        %382 = vmatprep.subr.mxu0 0.0
        %383 = vmatpush1.msra.mxu0 0.0
        %384 = vmatprep.subr.mxu0 0.0
        %385 = vmatpush1.msra.mxu0 0.0
        %386 = vmatprep.subr.mxu0 0.0
        %387 = vmatpush1.msra.mxu0 0.0
        %388 = vmatprep.subr.mxu0 0.0
        %389 = vmatpush1.msra.mxu0 0.0
        %390 = vmatprep.subr.mxu0 0.0
        %391 = vmatpush1.msra.mxu0 0.0
        %392 = vmatprep.subr.mxu0 0.0
        %393 = vmatpush1.msra.mxu0 0.0
        %394 = vmatprep.subr.mxu0 0.0
        %395 = vmatpush1.msra.mxu0 0.0
        %396 = vmatprep.subr.mxu0 0.0
        %397 = vmatpush1.msra.mxu0 0.0
        %398 = vmatprep.subr.mxu0 0.0
        %399 = vmatpush1.msra.mxu0 0.0
        %400 = vmatprep.subr.mxu0 0.0
        %401 = vmatpush1.msra.mxu0 0.0
        %402 = vmatprep.subr.mxu0 0.0
        %403 = vmatpush1.msra.mxu0 %v296
        %404 = vmatprep.subr.mxu0 0.0
        %405 = vmatpush1.msra.mxu0 %v295
        %406 = vmatprep.subr.mxu0 0.0
        %407 = vmatpush1.msra.mxu0 %v294
        %408 = vmatprep.subr.mxu0 0.0
        %409 = vmatpush1.msra.mxu0 %v293
        %410 = vmatprep.subr.mxu0 0.0
        %411 = vmatpush2.msra.mxu0 0.0
        %412 = vmatprep.subr.mxu0 0.0
        %413 = vmatpush2.msra.mxu0 0.0
        %414 = vmatprep.subr.mxu0 0.0
        %415 = vmatpush2.msra.mxu0 0.0
        %416 = vmatprep.subr.mxu0 0.0
        %417 = vmatpush2.msra.mxu0 0.0
        %418 = vmatprep.subr.mxu0 0.0
        %419 = vmatpush2.msra.mxu0 0.0
        %420 = vmatprep.subr.mxu0 0.0
        %421 = vmatpush2.msra.mxu0 0.0
        %422 = vmatprep.subr.mxu0 0.0
        %423 = vmatpush2.msra.mxu0 0.0
        %424 = vmatprep.subr.mxu0 0.0
        %425 = vmatpush2.msra.mxu0 0.0
        %426 = vmatprep.subr.mxu0 0.0
        %427 = vmatpush2.msra.mxu0 0.0
        %428 = vmatprep.subr.mxu0 0.0
        %429 = vmatpush2.msra.mxu0 0.0
        %430 = vmatprep.subr.mxu0 0.0
        %431 = vmatpush2.msra.mxu0 0.0
        %432 = vmatprep.subr.mxu0 0.0
        %433 = vmatpush2.msra.mxu0 0.0
        %434 = vmatprep.subr.mxu0 0.0
        %435 = vmatpush2.msra.mxu0 0.0
        %436 = vmatprep.subr.mxu0 0.0
        %437 = vmatpush2.msra.mxu0 0.0
        %438 = vmatprep.subr.mxu0 0.0
        %439 = vmatpush2.msra.mxu0 0.0
        %440 = vmatprep.subr.mxu0 0.0
        %441 = vmatpush2.msra.mxu0 0.0
        %442 = vmatprep.mubr.f32.mxu0 0.0
        %443 = vmatmul.mubr.f32.gmra.mxu0 %v376
        %v444 = vpop.f32.mrf.mxu0
        %v445 = vadd.f32 %v372, %v444
        %v446 = vpop.f32.mrf.mxu0
        %447 = vdwg.mxu0
        %v448 = vld [vmem:[%s4] sm:$0x1]
        %v450 = vlaneseq
        %v451 = vshrl.u32 %v450, 7
        %v452 = vsub.s32 0, %v451
        %v453 = vrot.slane %v448, %v452
        %v455 = vadd.f32 %v445, %v453
        %v456 = vmax.f32 %v455, 0.0
        %v457 = vld [vmem:[%s5] sm:$0xff]
        %v458 = vld [vmem:[%s5 + $0x8] sm:$0xff]
        %v459 = vld [vmem:[%s5 + $0x10] sm:$0xff]
        %v460 = vld [vmem:[%s5 + $0x18] sm:$0xff]
        %v461 = vld [vmem:[%s5 + $0x20] sm:$0xff]
        %v462 = vld [vmem:[%s5 + $0x28] sm:$0xff]
        %v463 = vld [vmem:[%s5 + $0x30] sm:$0xff]
        %v464 = vld [vmem:[%s5 + $0x38] sm:$0xff]
        %v465 = vld [vmem:[%s5 + $0x40] sm:$0xff]
        %v466 = vld [vmem:[%s5 + $0x48] sm:$0xff]
        %v467 = vld [vmem:[%s5 + $0x50] sm:$0xff]
        %v468 = vld [vmem:[%s5 + $0x58] sm:$0xff]
        %v469 = vld [vmem:[%s5 + $0x60] sm:$0xff]
        %v470 = vld [vmem:[%s5 + $0x68] sm:$0xff]
        %v471 = vld [vmem:[%s5 + $0x70] sm:$0xff]
        %v472 = vld [vmem:[%s5 + $0x78] sm:$0xff]
        %v473 = vld [vmem:[%s6] sm:$0x1]
        %v475 = vlaneseq
        %v476 = vshrl.u32 %v475, 7
        %v477 = vsub.s32 0, %v476
        %v478 = vrot.slane %v473, %v477
        %480 = vmatprep.subr.mxu0 0.0
        %481 = vmatpush1.msra.mxu0 %v472
        %482 = vmatprep.subr.mxu0 0.0
        %483 = vmatpush1.msra.mxu0 %v471
        %484 = vmatprep.subr.mxu0 0.0
        %485 = vmatpush1.msra.mxu0 %v470
        %486 = vmatprep.subr.mxu0 0.0
        %487 = vmatpush1.msra.mxu0 %v469
        %488 = vmatprep.subr.mxu0 0.0
        %489 = vmatpush1.msra.mxu0 %v468
        %490 = vmatprep.subr.mxu0 0.0
        %491 = vmatpush1.msra.mxu0 %v467
        %492 = vmatprep.subr.mxu0 0.0
        %493 = vmatpush1.msra.mxu0 %v466
        %494 = vmatprep.subr.mxu0 0.0
        %495 = vmatpush1.msra.mxu0 %v465
        %496 = vmatprep.subr.mxu0 0.0
        %497 = vmatpush1.msra.mxu0 %v464
        %498 = vmatprep.subr.mxu0 0.0
        %499 = vmatpush1.msra.mxu0 %v463
        %500 = vmatprep.subr.mxu0 0.0
        %501 = vmatpush1.msra.mxu0 %v462
        %502 = vmatprep.subr.mxu0 0.0
        %503 = vmatpush1.msra.mxu0 %v461
        %504 = vmatprep.subr.mxu0 0.0
        %505 = vmatpush1.msra.mxu0 %v460
        %506 = vmatprep.subr.mxu0 0.0
        %507 = vmatpush1.msra.mxu0 %v459
        %508 = vmatprep.subr.mxu0 0.0
        %509 = vmatpush1.msra.mxu0 %v458
        %510 = vmatprep.subr.mxu0 0.0
        %511 = vmatpush1.msra.mxu0 %v457
        %512 = vmatprep.subr.mxu0 0.0
        %513 = vmatpush2.msra.mxu0 0.0
        %514 = vmatprep.subr.mxu0 0.0
        %515 = vmatpush2.msra.mxu0 0.0
        %516 = vmatprep.subr.mxu0 0.0
        %517 = vmatpush2.msra.mxu0 0.0
        %518 = vmatprep.subr.mxu0 0.0
        %519 = vmatpush2.msra.mxu0 0.0
        %520 = vmatprep.subr.mxu0 0.0
        %521 = vmatpush2.msra.mxu0 0.0
        %522 = vmatprep.subr.mxu0 0.0
        %523 = vmatpush2.msra.mxu0 0.0
        %524 = vmatprep.subr.mxu0 0.0
        %525 = vmatpush2.msra.mxu0 0.0
        %526 = vmatprep.subr.mxu0 0.0
        %527 = vmatpush2.msra.mxu0 0.0
        %528 = vmatprep.subr.mxu0 0.0
        %529 = vmatpush2.msra.mxu0 0.0
        %530 = vmatprep.subr.mxu0 0.0
        %531 = vmatpush2.msra.mxu0 0.0
        %532 = vmatprep.subr.mxu0 0.0
        %533 = vmatpush2.msra.mxu0 0.0
        %534 = vmatprep.subr.mxu0 0.0
        %535 = vmatpush2.msra.mxu0 0.0
        %536 = vmatprep.subr.mxu0 0.0
        %537 = vmatpush2.msra.mxu0 0.0
        %538 = vmatprep.subr.mxu0 0.0
        %539 = vmatpush2.msra.mxu0 0.0
        %540 = vmatprep.subr.mxu0 0.0
        %541 = vmatpush2.msra.mxu0 0.0
        %542 = vmatprep.subr.mxu0 0.0
        %543 = vmatpush2.msra.mxu0 0.0
        %544 = vmatprep.mubr.f32.mxu0 0.0
        %545 = vmatmul.mubr.f32.gmra.mxu0 %v456
        %v546 = vpop.f32.mrf.mxu0
        %v547 = vadd.f32 %v478, %v546
        %v548 = vpop.f32.mrf.mxu0
        %549 = vdwg.mxu0
        %550 = vst.msk [vmem:[%s282] sm:$0xff] %vm301, %v547
        %s551 = sand.u32 %s186, 1
        %s552 = scalar_lea.sflag [#allocation3], %s551
        %s553 = sand.u32 %s186, 1
        %s554 = smul.addr %s553, 8
        %s555 = scalar_lea.vmem [#allocation2], %s554
        // Predicated region
        $region49: #{tpu_custom_call.1} parent=47 // pred_check
          %p556 = pneg %p196
        $region50: #{tpu_custom_call.1} parent=47 // pred_check_branch
          %558 = sbr.rel (%p556) target = $region52
        $region51: #{tpu_custom_call.1} parent=47 // pred_region
          %s560 = ssub.s32 128, 128
          %561 = vsyncadd %s552, %s560
          %s562 = smul.addr %s21, 128
          %s563 = scalar_lea.hbm %s7, %s562
          %s565 = sshll.u32 %s555, 4
          %s566 = int_to_ptr.vmem [resolvable:$true] %s565
          %568 = dma.vmem_to_hbm [thread:$0]  %s566, 128, %s563, %s552
        $region52: #{tpu_custom_call.1} parent=47 // pred_fallthru
          _
      $region48: #{tpu_custom_call.1} parent=5 // pred_fallthru
        _
      %p569 = scmp.le.s32.totalorder 2, %s16
      // Predicated region
      $region53: #{tpu_custom_call.1} parent=5 // pred_check
        %p570 = pneg %p569
      $region54: #{tpu_custom_call.1} parent=5 // pred_check_branch
        %572 = sbr.rel (%p570) target = $region56
      $region55: #{tpu_custom_call.1} parent=5 // pred_region
        %s573 = ssub.s32 %s16, 2
        // Predicated region
        $region57: #{tpu_custom_call.1} parent=55 // pred_check
          %p574 = pneg %p202
        $region58: #{tpu_custom_call.1} parent=55 // pred_check_branch
          %576 = sbr.rel (%p574) target = $region60
        $region59: #{tpu_custom_call.1} parent=55 // pred_region
          %s577 = sand.u32 %s187, 1
          %s578 = scalar_lea.sflag [#allocation3], %s577
          %s579 = sand.u32 %s187, 1
          %s580 = smul.addr %s579, 8
          %s581 = scalar_lea.vmem [#allocation2], %s580
          %582 = dma.done %s578, 128
        $region60: #{tpu_custom_call.1} parent=55 // pred_fallthru
          _
      $region56: #{tpu_custom_call.1} parent=5 // pred_fallthru
        _
    $region6: #{tpu_custom_call.1} parent=1 // loop_footer
      %s20 = sadd.s32 1, %s16
    $region7: #{tpu_custom_call.1} parent=1 // loop_footer_branch
      %15 = sbr.rel target = $region3
    $region8: #{tpu_custom_call.1} parent=1 // loop_exit
      _
    %583 = vsyncpa [#allocation3], 1
    %s584 = scalar_lea.sflag [#allocation3], 1
    %585 = vsyncpa %s584, 1

// kernel: tpu_custom_call.1
$region0: #{tpu_custom_call.1}
  #allocation0 [shape = 'u32[]', space=smem, size = 0x4, offset = 0x4, fixed_abs, tag = 'smem constant byte address 0x4 - core index']
  #allocation1 [shape = 'u32[144,128]{1,0:T(1,128)}', space=vmem, size = 0x12000, scoped, tag = 'internal scratch']
  %s0 = inlined_call_operand.vmem [shape: f32[24,32], index: 0, kind: input, shape index: {}]
  %s1 = inlined_call_operand.vmem [shape: f32[24,32], index: 1, kind: input, shape index: {}]
  %s2 = inlined_call_operand.vmem [shape: f32[32,128], index: 2, kind: input, shape index: {}]
  %s3 = inlined_call_operand.vmem [shape: f32[32,128], index: 3, kind: input, shape index: {}]
  %s4 = inlined_call_operand.vmem [shape: f32[1,128], index: 4, kind: input, shape index: {}]
  %s5 = inlined_call_operand.vmem [shape: f32[128,32], index: 5, kind: input, shape index: {}]
  %s6 = inlined_call_operand.vmem [shape: f32[1,32], index: 6, kind: input, shape index: {}]
  %s7 = inlined_call_operand.hbm [shape: f32[24,32], index: 7, kind: output, shape index: {}]
  %s8 = sld [smem:[#allocation0]]
  $region61: #{tpu_custom_call.1} parent=0
    _
  %s10 = ssub.s32 1, %s8
  %s11 = scalar_select 0, %s10, %s8
  $region1: #{tpu_custom_call.1} parent=0
    #allocation2 [shape = 'u8[8192]{0}', space=vmem, size = 0x2000, scoped, tag = 'output window, operand 0']
    #allocation3 [shape = 's32[2]{0}', space=sflag, size = 0x8, scoped, tag = 'scoped memory for tpu_custom_call.1']
    %12 = vsyncpa [#allocation3], 0
    %s13 = scalar_lea.sflag [#allocation3], 1
    %14 = vsyncpa %s13, 0
    loop: start=0, step=1, limit=5
    $region2: #{tpu_custom_call.1} parent=1 // loop_pre_header
      _
    $region3: #{tpu_custom_call.1} parent=1 // loop_header
      %s16 = sphi 0, %s20
      %p17 = scmp.ge.s32.totalorder %s16, 5
      %s26 = sphi 0, %s28
      %s29 = sphi 0, %s26
      %s30 = sphi 0, %s29
      %s46 = sphi 0, %s30
      %s52 = sphi 0, %s54
      %s55 = sphi 0, %s52
      %s56 = sphi 0, %s55
      %s72 = sphi 0, %s56
      %s76 = sphi 0, %s76
      %s78 = sphi 0, %s76
      %s79 = sphi 0, %s78
      %s93 = sphi 0, %s79
      %s97 = sphi 0, %s97
      %s99 = sphi 0, %s97
      %s100 = sphi 0, %s99
      %s114 = sphi 0, %s100
      %s118 = sphi 0, %s118
      %s120 = sphi 0, %s118
      %s121 = sphi 0, %s120
      %s135 = sphi 0, %s121
      %s139 = sphi 0, %s139
      %s141 = sphi 0, %s139
      %s142 = sphi 0, %s141
      %s156 = sphi 0, %s142
      %s160 = sphi 0, %s160
      %s162 = sphi 0, %s160
      %s163 = sphi 0, %s162
      %s177 = sphi 0, %s163
      %s183 = sphi 0, %s185
      %s186 = sphi 0, %s183
      %s187 = sphi 0, %s186
      %s203 = sphi 0, %s187
    $region4: #{tpu_custom_call.1} parent=1 // loop_header_branch
      %19 = sbr.rel (%p17) target = $region8
    $region5: #{tpu_custom_call.1} parent=1 // loop_body
      %s21 = ssub.s32 %s16, 1
      %s22 = ssub.s32 %s16, 2
      %s23 = sadd.s32 %s16, 1
      %s24 = ssub.s32 %s16, %s23
      %p25 = scmp.eq.s32.totalorder %s24, 0
      %s27 = sadd.s32 %s26, 1
      %s28 = scalar_select %p25, %s26, %s27
      %p31 = pneg %p25
      %p32 = scmp.eq.s32.totalorder %s16, 2
      %p33 = por %p31, %p32
      %p34 = scmp.ne.s32.totalorder %s26, %s29
      %p35 = scmp.eq.s32.totalorder %s16, 0
      %p36 = por %p34, %p35
      %p37 = scmp.ne.s32.totalorder %s26, %s29
      %p38 = scmp.eq.s32.totalorder %s21, 2
      %p39 = por %p37, %p38
      %p40 = scmp.ne.s32.totalorder %s29, %s30
      %p41 = scmp.eq.s32.totalorder %s21, 0
      %p42 = por %p40, %p41
      %p43 = scmp.ne.s32.totalorder %s29, %s30
      %p44 = scmp.eq.s32.totalorder %s22, 2
      %p45 = por %p43, %p44
      %p47 = scmp.ne.s32.totalorder %s30, %s46
      %p48 = scmp.eq.s32.totalorder %s22, 0
      %p49 = por %p47, %p48
      %s50 = ssub.s32 %s16, %s23
      %p51 = scmp.eq.s32.totalorder %s50, 0
      %s53 = sadd.s32 %s52, 1
      %s54 = scalar_select %p51, %s52, %s53
      %p57 = pneg %p51
      %p58 = scmp.eq.s32.totalorder %s16, 2
      %p59 = por %p57, %p58
      %p60 = scmp.ne.s32.totalorder %s52, %s55
      %p61 = scmp.eq.s32.totalorder %s16, 0
      %p62 = por %p60, %p61
      %p63 = scmp.ne.s32.totalorder %s52, %s55
      %p64 = scmp.eq.s32.totalorder %s21, 2
      %p65 = por %p63, %p64
      %p66 = scmp.ne.s32.totalorder %s55, %s56
      %p67 = scmp.eq.s32.totalorder %s21, 0
      %p68 = por %p66, %p67
      %p69 = scmp.ne.s32.totalorder %s55, %s56
      %p70 = scmp.eq.s32.totalorder %s22, 2
      %p71 = por %p69, %p70
      %p73 = scmp.ne.s32.totalorder %s56, %s72
      %p74 = scmp.eq.s32.totalorder %s22, 0
      %p75 = por %p73, %p74
      %s77 = sadd.s32 %s76, 1
      %p80 = scmp.eq.s32.totalorder %s16, 2
      %p81 = scmp.ne.s32.totalorder %s76, %s78
      %p82 = scmp.eq.s32.totalorder %s16, 0
      %p83 = por %p81, %p82
      %p84 = scmp.ne.s32.totalorder %s76, %s78
      %p85 = scmp.eq.s32.totalorder %s21, 2
      %p86 = por %p84, %p85
      %p87 = scmp.ne.s32.totalorder %s78, %s79
      %p88 = scmp.eq.s32.totalorder %s21, 0
      %p89 = por %p87, %p88
      %p90 = scmp.ne.s32.totalorder %s78, %s79
      %p91 = scmp.eq.s32.totalorder %s22, 2
      %p92 = por %p90, %p91
      %p94 = scmp.ne.s32.totalorder %s79, %s93
      %p95 = scmp.eq.s32.totalorder %s22, 0
      %p96 = por %p94, %p95
      %s98 = sadd.s32 %s97, 1
      %p101 = scmp.eq.s32.totalorder %s16, 2
      %p102 = scmp.ne.s32.totalorder %s97, %s99
      %p103 = scmp.eq.s32.totalorder %s16, 0
      %p104 = por %p102, %p103
      %p105 = scmp.ne.s32.totalorder %s97, %s99
      %p106 = scmp.eq.s32.totalorder %s21, 2
      %p107 = por %p105, %p106
      %p108 = scmp.ne.s32.totalorder %s99, %s100
      %p109 = scmp.eq.s32.totalorder %s21, 0
      %p110 = por %p108, %p109
      %p111 = scmp.ne.s32.totalorder %s99, %s100
      %p112 = scmp.eq.s32.totalorder %s22, 2
      %p113 = por %p111, %p112
      %p115 = scmp.ne.s32.totalorder %s100, %s114
      %p116 = scmp.eq.s32.totalorder %s22, 0
      %p117 = por %p115, %p116
      %s119 = sadd.s32 %s118, 1
      %p122 = scmp.eq.s32.totalorder %s16, 2
      %p123 = scmp.ne.s32.totalorder %s118, %s120
      %p124 = scmp.eq.s32.totalorder %s16, 0
      %p125 = por %p123, %p124
      %p126 = scmp.ne.s32.totalorder %s118, %s120
      %p127 = scmp.eq.s32.totalorder %s21, 2
      %p128 = por %p126, %p127
      %p129 = scmp.ne.s32.totalorder %s120, %s121
      %p130 = scmp.eq.s32.totalorder %s21, 0
      %p131 = por %p129, %p130
      %p132 = scmp.ne.s32.totalorder %s120, %s121
      %p133 = scmp.eq.s32.totalorder %s22, 2
      %p134 = por %p132, %p133
      %p136 = scmp.ne.s32.totalorder %s121, %s135
      %p137 = scmp.eq.s32.totalorder %s22, 0
      %p138 = por %p136, %p137
      %s140 = sadd.s32 %s139, 1
      %p143 = scmp.eq.s32.totalorder %s16, 2
      %p144 = scmp.ne.s32.totalorder %s139, %s141
      %p145 = scmp.eq.s32.totalorder %s16, 0
      %p146 = por %p144, %p145
      %p147 = scmp.ne.s32.totalorder %s139, %s141
      %p148 = scmp.eq.s32.totalorder %s21, 2
      %p149 = por %p147, %p148
      %p150 = scmp.ne.s32.totalorder %s141, %s142
      %p151 = scmp.eq.s32.totalorder %s21, 0
      %p152 = por %p150, %p151
      %p153 = scmp.ne.s32.totalorder %s141, %s142
      %p154 = scmp.eq.s32.totalorder %s22, 2
      %p155 = por %p153, %p154
      %p157 = scmp.ne.s32.totalorder %s142, %s156
      %p158 = scmp.eq.s32.totalorder %s22, 0
      %p159 = por %p157, %p158
      %s161 = sadd.s32 %s160, 1
      %p164 = scmp.eq.s32.totalorder %s16, 2
      %p165 = scmp.ne.s32.totalorder %s160, %s162
      %p166 = scmp.eq.s32.totalorder %s16, 0
      %p167 = por %p165, %p166
      %p168 = scmp.ne.s32.totalorder %s160, %s162
      %p169 = scmp.eq.s32.totalorder %s21, 2
      %p170 = por %p168, %p169
      %p171 = scmp.ne.s32.totalorder %s162, %s163
      %p172 = scmp.eq.s32.totalorder %s21, 0
      %p173 = por %p171, %p172
      %p174 = scmp.ne.s32.totalorder %s162, %s163
      %p175 = scmp.eq.s32.totalorder %s22, 2
      %p176 = por %p174, %p175
      %p178 = scmp.ne.s32.totalorder %s163, %s177
      %p179 = scmp.eq.s32.totalorder %s22, 0
      %p180 = por %p178, %p179
      %s181 = ssub.s32 %s16, %s23
      %p182 = scmp.eq.s32.totalorder %s181, 0
      %s184 = sadd.s32 %s183, 1
      %s185 = scalar_select %p182, %s183, %s184
      %p188 = pneg %p182
      %p189 = scmp.eq.s32.totalorder %s16, 2
      %p190 = por %p188, %p189
      %p191 = scmp.ne.s32.totalorder %s183, %s186
      %p192 = scmp.eq.s32.totalorder %s16, 0
      %p193 = por %p191, %p192
      %p194 = scmp.ne.s32.totalorder %s183, %s186
      %p195 = scmp.eq.s32.totalorder %s21, 2
      %p196 = por %p194, %p195
      %p197 = scmp.ne.s32.totalorder %s186, %s187
      %p198 = scmp.eq.s32.totalorder %s21, 0
      %p199 = por %p197, %p198
      %p200 = scmp.ne.s32.totalorder %s186, %s187
      %p201 = scmp.eq.s32.totalorder %s22, 2
      %p202 = por %p200, %p201
      %p204 = scmp.ne.s32.totalorder %s187, %s203
      %p205 = scmp.eq.s32.totalorder %s22, 0
      %p206 = por %p204, %p205
      %p207 = scmp.le.s32.totalorder 1, %s16
      %p208 = scmp.lt.s32.totalorder %s16, 4
      %p209 = pnand %p207, %p208
      %p210 = pneg %p209
      // Predicated region
      $region9: #{tpu_custom_call.1} parent=5 // pred_check
        _
      $region10: #{tpu_custom_call.1} parent=5 // pred_check_branch
        %212 = sbr.rel (%p209) target = $region12
      $region11: #{tpu_custom_call.1} parent=5 // pred_region
        %s213 = ssub.s32 %s16, 1
        // Predicated region
        $region13: #{tpu_custom_call.1} parent=11 // pred_check
          %p214 = pneg %p89
        $region14: #{tpu_custom_call.1} parent=11 // pred_check_branch
          %216 = sbr.rel (%p214) target = $region16
        $region15: #{tpu_custom_call.1} parent=11 // pred_region
          _
        $region16: #{tpu_custom_call.1} parent=11 // pred_fallthru
          _
        // Predicated region
        $region17: #{tpu_custom_call.1} parent=11 // pred_check
          %p217 = pneg %p110
        $region18: #{tpu_custom_call.1} parent=11 // pred_check_branch
          %219 = sbr.rel (%p217) target = $region20
        $region19: #{tpu_custom_call.1} parent=11 // pred_region
          _
        $region20: #{tpu_custom_call.1} parent=11 // pred_fallthru
          _
        // Predicated region
        $region21: #{tpu_custom_call.1} parent=11 // pred_check
          %p220 = pneg %p131
        $region22: #{tpu_custom_call.1} parent=11 // pred_check_branch
          %222 = sbr.rel (%p220) target = $region24
        $region23: #{tpu_custom_call.1} parent=11 // pred_region
          _
        $region24: #{tpu_custom_call.1} parent=11 // pred_fallthru
          _
        // Predicated region
        $region25: #{tpu_custom_call.1} parent=11 // pred_check
          %p223 = pneg %p152
        $region26: #{tpu_custom_call.1} parent=11 // pred_check_branch
          %225 = sbr.rel (%p223) target = $region28
        $region27: #{tpu_custom_call.1} parent=11 // pred_region
          _
        $region28: #{tpu_custom_call.1} parent=11 // pred_fallthru
          _
        // Predicated region
        $region29: #{tpu_custom_call.1} parent=11 // pred_check
          %p226 = pneg %p173
        $region30: #{tpu_custom_call.1} parent=11 // pred_check_branch
          %228 = sbr.rel (%p226) target = $region32
        $region31: #{tpu_custom_call.1} parent=11 // pred_region
          _
        $region32: #{tpu_custom_call.1} parent=11 // pred_fallthru
          _
      $region12: #{tpu_custom_call.1} parent=5 // pred_fallthru
        _
      %p229 = scmp.lt.s32.totalorder %s16, 3
      // Predicated region
      $region33: #{tpu_custom_call.1} parent=5 // pred_check
        %p230 = pneg %p229
      $region34: #{tpu_custom_call.1} parent=5 // pred_check_branch
        %232 = sbr.rel (%p230) target = $region36
      $region35: #{tpu_custom_call.1} parent=5 // pred_region
        // Predicated region
        $region37: #{tpu_custom_call.1} parent=35 // pred_check
          %p233 = pneg %p36
        $region38: #{tpu_custom_call.1} parent=35 // pred_check_branch
          %235 = sbr.rel (%p233) target = $region40
        $region39: #{tpu_custom_call.1} parent=35 // pred_region
          %p236 = scmp.lt.s32.totalorder %s16, 2
          %s237 = scalar_select %p236, %s16, 2
          %s238 = smul.addr %s237, 8
          %s239 = scalar_lea.vmem %s0, %s238
        $region40: #{tpu_custom_call.1} parent=35 // pred_fallthru
          _
        // Predicated region
        $region41: #{tpu_custom_call.1} parent=35 // pred_check
          %p240 = pneg %p62
        $region42: #{tpu_custom_call.1} parent=35 // pred_check_branch
          %242 = sbr.rel (%p240) target = $region44
        $region43: #{tpu_custom_call.1} parent=35 // pred_region
          %p243 = scmp.lt.s32.totalorder %s16, 2
          %s244 = scalar_select %p243, %s16, 2
          %s245 = smul.addr %s244, 8
          %s246 = scalar_lea.vmem %s1, %s245
        $region44: #{tpu_custom_call.1} parent=35 // pred_fallthru
          _
      $region36: #{tpu_custom_call.1} parent=5 // pred_fallthru
        _
      %p247 = scmp.le.s32.totalorder 1, %s16
      %p248 = scmp.lt.s32.totalorder %s16, 4
      %p249 = pnand %p247, %p248
      %p250 = pneg %p249
      // Predicated region
      $region45: #{tpu_custom_call.1} parent=5 // pred_check
        _
      $region46: #{tpu_custom_call.1} parent=5 // pred_check_branch
        %252 = sbr.rel (%p249) target = $region48
      $region47: #{tpu_custom_call.1} parent=5 // pred_region
        %s253 = ssub.s32 %s16, 1
        %p254 = scmp.lt.s32.totalorder %s21, 2
        %s255 = scalar_select %p254, %s21, 2
        %s256 = smul.addr %s255, 8
        %s257 = scalar_lea.vmem %s0, %s256
        %p258 = pneg %p42
        %p259 = pneg %p39
        %p260 = scmp.lt.s32.totalorder %s21, 2
        %s261 = scalar_select %p260, %s21, 2
        %s262 = smul.addr %s261, 8
        %s263 = scalar_lea.vmem %s1, %s262
        %p264 = pneg %p68
        %p265 = pneg %p65
        %p266 = pneg %p89
        %p267 = pneg %p86
        %p268 = pneg %p110
        %p269 = pneg %p107
        %p270 = pneg %p131
        %p271 = pneg %p128
        %p272 = pneg %p152
        %p273 = pneg %p149
        %p274 = pneg %p173
        %p275 = pneg %p170
        %p276 = pneg %p199
        %p277 = pneg %p196
        %s278 = sand.u32 %s186, 1
        %s279 = scalar_lea.sflag [#allocation3], %s278
        %s280 = sand.u32 %s186, 1
        %s281 = smul.addr %s280, 8
        %s282 = scalar_lea.vmem [#allocation2], %s281
        %p283 = scmp.lt.s32.totalorder %s21, 2
        %s284 = scalar_select %p283, %s21, 2
        %s285 = smul.addr %s284, 8
        %s286 = scalar_lea.vmem %s0, %s285
        %p287 = scmp.lt.s32.totalorder %s21, 2
        %s288 = scalar_select %p287, %s21, 2
        %s289 = smul.addr %s288, 8
        %s290 = scalar_lea.vmem %s1, %s289
        %v291 = vld [vmem:[%s286] sm:$0xff]
        %v292 = vld [vmem:[%s290] sm:$0xff]
        %v293 = vld [vmem:[%s2] sm:$0xff]
        %v294 = vld [vmem:[%s2 + $0x8] sm:$0xff]
        %v295 = vld [vmem:[%s2 + $0x10] sm:$0xff]
        %v296 = vld [vmem:[%s2 + $0x18] sm:$0xff]
        %v297 = vld [vmem:[%s3] sm:$0xff]
        %v298 = vld [vmem:[%s3 + $0x8] sm:$0xff]
        %v299 = vld [vmem:[%s3 + $0x10] sm:$0xff]
        %v300 = vld [vmem:[%s3 + $0x18] sm:$0xff]
        %vm301 = vcmask 261120
        %v303 = vsel %vm301, %v292, 0
        %305 = vmatprep.subr.mxu0 0.0
        %306 = vmatpush1.msra.mxu0 0.0
        %307 = vmatprep.subr.mxu0 0.0
        %308 = vmatpush1.msra.mxu0 0.0
        %309 = vmatprep.subr.mxu0 0.0
        %310 = vmatpush1.msra.mxu0 0.0
        %311 = vmatprep.subr.mxu0 0.0
        %312 = vmatpush1.msra.mxu0 0.0
        %313 = vmatprep.subr.mxu0 0.0
        %314 = vmatpush1.msra.mxu0 0.0
        %315 = vmatprep.subr.mxu0 0.0
        %316 = vmatpush1.msra.mxu0 0.0
        %317 = vmatprep.subr.mxu0 0.0
        %318 = vmatpush1.msra.mxu0 0.0
        %319 = vmatprep.subr.mxu0 0.0
        %320 = vmatpush1.msra.mxu0 0.0
        %321 = vmatprep.subr.mxu0 0.0
        %322 = vmatpush1.msra.mxu0 0.0
        %323 = vmatprep.subr.mxu0 0.0
        %324 = vmatpush1.msra.mxu0 0.0
        %325 = vmatprep.subr.mxu0 0.0
        %326 = vmatpush1.msra.mxu0 0.0
        %327 = vmatprep.subr.mxu0 0.0
        %328 = vmatpush1.msra.mxu0 0.0
        %329 = vmatprep.subr.mxu0 0.0
        %330 = vmatpush1.msra.mxu0 %v300
        %331 = vmatprep.subr.mxu0 0.0
        %332 = vmatpush1.msra.mxu0 %v299
        %333 = vmatprep.subr.mxu0 0.0
        %334 = vmatpush1.msra.mxu0 %v298
        %335 = vmatprep.subr.mxu0 0.0
        %336 = vmatpush1.msra.mxu0 %v297
        %337 = vmatprep.subr.mxu0 0.0
        %338 = vmatpush2.msra.mxu0 0.0
        %339 = vmatprep.subr.mxu0 0.0
        %340 = vmatpush2.msra.mxu0 0.0
        %341 = vmatprep.subr.mxu0 0.0
        %342 = vmatpush2.msra.mxu0 0.0
        %343 = vmatprep.subr.mxu0 0.0
        %344 = vmatpush2.msra.mxu0 0.0
        %345 = vmatprep.subr.mxu0 0.0
        %346 = vmatpush2.msra.mxu0 0.0
        %347 = vmatprep.subr.mxu0 0.0
        %348 = vmatpush2.msra.mxu0 0.0
        %349 = vmatprep.subr.mxu0 0.0
        %350 = vmatpush2.msra.mxu0 0.0
        %351 = vmatprep.subr.mxu0 0.0
        %352 = vmatpush2.msra.mxu0 0.0
        %353 = vmatprep.subr.mxu0 0.0
        %354 = vmatpush2.msra.mxu0 0.0
        %355 = vmatprep.subr.mxu0 0.0
        %356 = vmatpush2.msra.mxu0 0.0
        %357 = vmatprep.subr.mxu0 0.0
        %358 = vmatpush2.msra.mxu0 0.0
        %359 = vmatprep.subr.mxu0 0.0
        %360 = vmatpush2.msra.mxu0 0.0
        %361 = vmatprep.subr.mxu0 0.0
        %362 = vmatpush2.msra.mxu0 0.0
        %363 = vmatprep.subr.mxu0 0.0
        %364 = vmatpush2.msra.mxu0 0.0
        %365 = vmatprep.subr.mxu0 0.0
        %366 = vmatpush2.msra.mxu0 0.0
        %367 = vmatprep.subr.mxu0 0.0
        %368 = vmatpush2.msra.mxu0 0.0
        %369 = vmatprep.mubr.f32.mxu0 0.0
        %370 = vmatmul.mubr.f32.gmra.mxu0 %v303
        %v371 = vpop.f32.mrf.mxu0
        %v372 = vadd.f32 0.0, %v371
        %v373 = vpop.f32.mrf.mxu0
        %374 = vdwg.mxu0
        %v376 = vsel %vm301, %v291, 0
        %378 = vmatprep.subr.mxu0 0.0
        %379 = vmatpush1.msra.mxu0 0.0
        %380 = vmatprep.subr.mxu0 0.0
        %381 = vmatpush1.msra.mxu0 0.0
        %382 = vmatprep.subr.mxu0 0.0
        %383 = vmatpush1.msra.mxu0 0.0
        %384 = vmatprep.subr.mxu0 0.0
        %385 = vmatpush1.msra.mxu0 0.0
        %386 = vmatprep.subr.mxu0 0.0
        %387 = vmatpush1.msra.mxu0 0.0
        %388 = vmatprep.subr.mxu0 0.0
        %389 = vmatpush1.msra.mxu0 0.0
        %390 = vmatprep.subr.mxu0 0.0
        %391 = vmatpush1.msra.mxu0 0.0
        %392 = vmatprep.subr.mxu0 0.0
        %393 = vmatpush1.msra.mxu0 0.0
        %394 = vmatprep.subr.mxu0 0.0
        %395 = vmatpush1.msra.mxu0 0.0
        %396 = vmatprep.subr.mxu0 0.0
        %397 = vmatpush1.msra.mxu0 0.0
        %398 = vmatprep.subr.mxu0 0.0
        %399 = vmatpush1.msra.mxu0 0.0
        %400 = vmatprep.subr.mxu0 0.0
        %401 = vmatpush1.msra.mxu0 0.0
        %402 = vmatprep.subr.mxu0 0.0
        %403 = vmatpush1.msra.mxu0 %v296
        %404 = vmatprep.subr.mxu0 0.0
        %405 = vmatpush1.msra.mxu0 %v295
        %406 = vmatprep.subr.mxu0 0.0
        %407 = vmatpush1.msra.mxu0 %v294
        %408 = vmatprep.subr.mxu0 0.0
        %409 = vmatpush1.msra.mxu0 %v293
        %410 = vmatprep.subr.mxu0 0.0
        %411 = vmatpush2.msra.mxu0 0.0
        %412 = vmatprep.subr.mxu0 0.0
        %413 = vmatpush2.msra.mxu0 0.0
        %414 = vmatprep.subr.mxu0 0.0
        %415 = vmatpush2.msra.mxu0 0.0
        %416 = vmatprep.subr.mxu0 0.0
        %417 = vmatpush2.msra.mxu0 0.0
        %418 = vmatprep.subr.mxu0 0.0
        %419 = vmatpush2.msra.mxu0 0.0
        %420 = vmatprep.subr.mxu0 0.0
        %421 = vmatpush2.msra.mxu0 0.0
        %422 = vmatprep.subr.mxu0 0.0
        %423 = vmatpush2.msra.mxu0 0.0
        %424 = vmatprep.subr.mxu0 0.0
        %425 = vmatpush2.msra.mxu0 0.0
        %426 = vmatprep.subr.mxu0 0.0
        %427 = vmatpush2.msra.mxu0 0.0
        %428 = vmatprep.subr.mxu0 0.0
        %429 = vmatpush2.msra.mxu0 0.0
        %430 = vmatprep.subr.mxu0 0.0
        %431 = vmatpush2.msra.mxu0 0.0
        %432 = vmatprep.subr.mxu0 0.0
        %433 = vmatpush2.msra.mxu0 0.0
        %434 = vmatprep.subr.mxu0 0.0
        %435 = vmatpush2.msra.mxu0 0.0
        %436 = vmatprep.subr.mxu0 0.0
        %437 = vmatpush2.msra.mxu0 0.0
        %438 = vmatprep.subr.mxu0 0.0
        %439 = vmatpush2.msra.mxu0 0.0
        %440 = vmatprep.subr.mxu0 0.0
        %441 = vmatpush2.msra.mxu0 0.0
        %442 = vmatprep.mubr.f32.mxu0 0.0
        %443 = vmatmul.mubr.f32.gmra.mxu0 %v376
        %v444 = vpop.f32.mrf.mxu0
        %v445 = vadd.f32 %v372, %v444
        %v446 = vpop.f32.mrf.mxu0
        %447 = vdwg.mxu0
        %v448 = vld [vmem:[%s4] sm:$0x1]
        %v450 = vlaneseq
        %v451 = vshrl.u32 %v450, 7
        %v452 = vsub.s32 0, %v451
        %v453 = vrot.slane %v448, %v452
        %v455 = vadd.f32 %v445, %v453
        %v456 = vmax.f32 %v455, 0.0
        %v457 = vld [vmem:[%s5] sm:$0xff]
        %v458 = vld [vmem:[%s5 + $0x8] sm:$0xff]
        %v459 = vld [vmem:[%s5 + $0x10] sm:$0xff]
        %v460 = vld [vmem:[%s5 + $0x18] sm:$0xff]
        %v461 = vld [vmem:[%s5 + $0x20] sm:$0xff]
        %v462 = vld [vmem:[%s5 + $0x28] sm:$0xff]
        %v463 = vld [vmem:[%s5 + $0x30] sm:$0xff]
        %v464 = vld [vmem:[%s5 + $0x38] sm:$0xff]
        %v465 = vld [vmem:[%s5 + $0x40] sm:$0xff]
        %v466 = vld [vmem:[%s5 + $0x48] sm:$0xff]
        %v467 = vld [vmem:[%s5 + $0x50] sm:$0xff]
        %v468 = vld [vmem:[%s5 + $0x58] sm:$0xff]
        %v469 = vld [vmem:[%s5 + $0x60] sm:$0xff]
        %v470 = vld [vmem:[%s5 + $0x68] sm:$0xff]
        %v471 = vld [vmem:[%s5 + $0x70] sm:$0xff]
        %v472 = vld [vmem:[%s5 + $0x78] sm:$0xff]
        %v473 = vld [vmem:[%s6] sm:$0x1]
        %v475 = vlaneseq
        %v476 = vshrl.u32 %v475, 7
        %v477 = vsub.s32 0, %v476
        %v478 = vrot.slane %v473, %v477
        %480 = vmatprep.subr.mxu0 0.0
        %481 = vmatpush1.msra.mxu0 %v472
        %482 = vmatprep.subr.mxu0 0.0
        %483 = vmatpush1.msra.mxu0 %v471
        %484 = vmatprep.subr.mxu0 0.0
        %485 = vmatpush1.msra.mxu0 %v470
        %486 = vmatprep.subr.mxu0 0.0
        %487 = vmatpush1.msra.mxu0 %v469
        %488 = vmatprep.subr.mxu0 0.0
        %489 = vmatpush1.msra.mxu0 %v468
        %490 = vmatprep.subr.mxu0 0.0
        %491 = vmatpush1.msra.mxu0 %v467
        %492 = vmatprep.subr.mxu0 0.0
        %493 = vmatpush1.msra.mxu0 %v466
        %494 = vmatprep.subr.mxu0 0.0
        %495 = vmatpush1.msra.mxu0 %v465
        %496 = vmatprep.subr.mxu0 0.0
        %497 = vmatpush1.msra.mxu0 %v464
        %498 = vmatprep.subr.mxu0 0.0
        %499 = vmatpush1.msra.mxu0 %v463
        %500 = vmatprep.subr.mxu0 0.0
        %501 = vmatpush1.msra.mxu0 %v462
        %502 = vmatprep.subr.mxu0 0.0
        %503 = vmatpush1.msra.mxu0 %v461
        %504 = vmatprep.subr.mxu0 0.0
        %505 = vmatpush1.msra.mxu0 %v460
        %506 = vmatprep.subr.mxu0 0.0
        %507 = vmatpush1.msra.mxu0 %v459
        %508 = vmatprep.subr.mxu0 0.0
        %509 = vmatpush1.msra.mxu0 %v458
        %510 = vmatprep.subr.mxu0 0.0
        %511 = vmatpush1.msra.mxu0 %v457
        %512 = vmatprep.subr.mxu0 0.0
        %513 = vmatpush2.msra.mxu0 0.0
        %514 = vmatprep.subr.mxu0 0.0
        %515 = vmatpush2.msra.mxu0 0.0
        %516 = vmatprep.subr.mxu0 0.0
        %517 = vmatpush2.msra.mxu0 0.0
        %518 = vmatprep.subr.mxu0 0.0
        %519 = vmatpush2.msra.mxu0 0.0
        %520 = vmatprep.subr.mxu0 0.0
        %521 = vmatpush2.msra.mxu0 0.0
        %522 = vmatprep.subr.mxu0 0.0
        %523 = vmatpush2.msra.mxu0 0.0
        %524 = vmatprep.subr.mxu0 0.0
        %525 = vmatpush2.msra.mxu0 0.0
        %526 = vmatprep.subr.mxu0 0.0
        %527 = vmatpush2.msra.mxu0 0.0
        %528 = vmatprep.subr.mxu0 0.0
        %529 = vmatpush2.msra.mxu0 0.0
        %530 = vmatprep.subr.mxu0 0.0
        %531 = vmatpush2.msra.mxu0 0.0
        %532 = vmatprep.subr.mxu0 0.0
        %533 = vmatpush2.msra.mxu0 0.0
        %534 = vmatprep.subr.mxu0 0.0
        %535 = vmatpush2.msra.mxu0 0.0
        %536 = vmatprep.subr.mxu0 0.0
        %537 = vmatpush2.msra.mxu0 0.0
        %538 = vmatprep.subr.mxu0 0.0
        %539 = vmatpush2.msra.mxu0 0.0
        %540 = vmatprep.subr.mxu0 0.0
        %541 = vmatpush2.msra.mxu0 0.0
        %542 = vmatprep.subr.mxu0 0.0
        %543 = vmatpush2.msra.mxu0 0.0
        %544 = vmatprep.mubr.f32.mxu0 0.0
        %545 = vmatmul.mubr.f32.gmra.mxu0 %v456
        %v546 = vpop.f32.mrf.mxu0
        %v547 = vadd.f32 %v478, %v546
        %v548 = vpop.f32.mrf.mxu0
        %549 = vdwg.mxu0
        %550 = vst.msk [vmem:[%s282] sm:$0xff] %vm301, %v547
        %s551 = sand.u32 %s186, 1
        %s552 = scalar_lea.sflag [#allocation3], %s551
        %s553 = sand.u32 %s186, 1
        %s554 = smul.addr %s553, 8
        %s555 = scalar_lea.vmem [#allocation2], %s554
        // Predicated region
        $region49: #{tpu_custom_call.1} parent=47 // pred_check
          %p556 = pneg %p196
        $region50: #{tpu_custom_call.1} parent=47 // pred_check_branch
          %558 = sbr.rel (%p556) target = $region52
        $region51: #{tpu_custom_call.1} parent=47 // pred_region
          %s560 = ssub.s32 128, 128
          %561 = vsyncadd %s552, %s560
          %s562 = smul.addr %s21, 128
          %s563 = scalar_lea.hbm %s7, %s562
          %s565 = sshll.u32 %s555, 4
          %s566 = int_to_ptr.vmem [resolvable:$true] %s565
          %568 = dma.vmem_to_hbm [thread:$0]  %s566, 128, %s563, %s552
        $region52: #{tpu_custom_call.1} parent=47 // pred_fallthru
          _
      $region48: #{tpu_custom_call.1} parent=5 // pred_fallthru
        _
      %p569 = scmp.le.s32.totalorder 2, %s16
      // Predicated region
      $region53: #{tpu_custom_call.1} parent=5 // pred_check
        %p570 = pneg %p569
      $region54: #{tpu_custom_call.1} parent=5 // pred_check_branch
        %572 = sbr.rel (%p570) target = $region56
      $region55: #{tpu_custom_call.1} parent=5 // pred_region
        %s573 = ssub.s32 %s16, 2
        // Predicated region
        $region57: #{tpu_custom_call.1} parent=55 // pred_check
          %p574 = pneg %p202
        $region58: #{tpu_custom_call.1} parent=55 // pred_check_branch
          %576 = sbr.rel (%p574) target = $region60
        $region59: #{tpu_custom_call.1} parent=55 // pred_region
          %s577 = sand.u32 %s187, 1
          %s578 = scalar_lea.sflag [#allocation3], %s577
          %s579 = sand.u32 %s187, 1
          %s580 = smul.addr %s579, 8
          %s581 = scalar_lea.vmem [#allocation2], %s580
          %582 = dma.done %s578, 128
        $region60: #{tpu_custom_call.1} parent=55 // pred_fallthru
          _
      $region56: #{tpu_custom_call.1} parent=5 // pred_fallthru
        _
    $region6: #{tpu_custom_call.1} parent=1 // loop_footer
      %s20 = sadd.s32 1, %s16
    $region7: #{tpu_custom_call.1} parent=1 // loop_footer_branch
      %15 = sbr.rel target = $region3
    $region8: #{tpu_custom_call.1} parent=1 // loop_exit
      _
    %583 = vsyncpa [#allocation3], 1
    %s584 = scalar_lea.sflag [#allocation3], 1
    %585 = vsyncpa %s584, 1

</llo_original>
